<compile_context>
chip_gen: v7x
topology: tpu7x:2x2x1
jax: 0.10.0
libtpu: 0.0.40
codegen_flags: <defaults>
</compile_context>

<pallas_src>
import functools

import jax
import jax.numpy as jnp
from jax.experimental import pallas as pl
from jax.experimental.pallas import tpu as pltpu


def _gem_kernel(p_ref, x_ref, o_ref, *, eps):
    # p_ref: SMEM scalar (1,) -- learnable exponent p.
    # x_ref: VMEM tile (TILE_R, H*W); o_ref: VMEM tile (TILE_R, 1).
    p = p_ref[0]
    inv_p = 1.0 / p                                          # scalar, once per tile
    x = jnp.maximum(x_ref[...].astype(jnp.float32), eps)     # clamp(min=eps) > 0
    # TODO(synk): if p is ever known statically to be a small integer (e.g. 3),
    # specialize to x*x*x to drop the per-element exp/log pair (EUP-bound on v7x).
    xp = jnp.exp(p * jnp.log(x))                             # x ** p
    m = jnp.mean(xp, axis=-1, keepdims=True)                 # avg pool over H*W
    o_ref[...] = jnp.exp(inv_p * jnp.log(m)).astype(o_ref.dtype)   # m ** (1/p)


def _round_up(v, m):
    return -(-v // m) * m


def _pick_tile_rows(rows, hw, itemsize):
    """Largest row tile whose double-buffered working set stays in VMEM."""
    sub = {4: 8, 2: 16, 1: 32}.get(itemsize, 8)   # min sublane multiple per dtype
    if rows <= sub:
        return rows                               # block == full array dim (allowed)
    budget = 24 * 1024 * 1024                     # ~24 MiB working-set target
    per_row = hw * (2 * itemsize + 8)             # 2x-buffered input + f32 temporaries
    t = min(max(budget // per_row, sub), 1024, _round_up(rows, sub))
    t = max(sub, (t // sub) * sub)
    if t >= rows:
        # keep >= 2 grid steps so both v7x TensorCores get a block
        t = max(sub, _round_up(-(-rows // 2), sub))
    return t


def gem(x, p, eps=1e-6):
    """GeM pooling. x: (N, C, H, W), p: (1,) float. Returns (N, C, 1, 1)."""
    N, C, H, W = x.shape
    rows, hw = N * C, H * W
    x2 = x.reshape(rows, hw)                      # no jnp.pad: ragged tail handled by grid
    itemsize = jnp.dtype(x.dtype).itemsize

    tile_r = _pick_tile_rows(rows, hw, itemsize)
    grid = (pl.cdiv(rows, tile_r),)

    cost = pl.CostEstimate(
        flops=3 * rows * hw,
        transcendentals=2 * rows * hw,
        bytes_accessed=rows * hw * itemsize + rows * itemsize + 4,
    )

    out = pl.pallas_call(
        functools.partial(_gem_kernel, eps=float(eps)),
        out_shape=jax.ShapeDtypeStruct((rows, 1), x.dtype),
        grid=grid,
        in_specs=[
            pl.BlockSpec(memory_space=pltpu.MemorySpace.SMEM),     # p (scalar)
            pl.BlockSpec((tile_r, hw), lambda i: (i, 0)),          # x slab
        ],
        out_specs=pl.BlockSpec((tile_r, 1), lambda i: (i, 0)),
        compiler_params=pltpu.CompilerParams(
            dimension_semantics=("parallel",),
            # above the 16/32 MiB default scoped limit, below v7x's 64 MiB physical
            vmem_limit_bytes=48 * 1024 * 1024,
        ),
        cost_estimate=cost,
    )(jnp.asarray(p, jnp.float32).reshape(-1), x2)

    return out.reshape(N, C, 1, 1)


def gem_reference(x, p, eps=1e-6):
    xc = jnp.maximum(x, eps)
    xp = xc ** p[0]
    m = jnp.mean(xp, axis=(-2, -1), keepdims=True)
    return m ** (1.0 / p[0])


if __name__ == "__main__":
    key = jax.random.PRNGKey(0)
    # Small NCHW input consistent with the module's forward.
    x = jax.random.normal(key, (2, 4, 16, 16), dtype=jnp.float32)
    # Deterministic parameter init, matching GeM.__init__: p = ones(1) * 3
    p = jnp.ones((1,), dtype=jnp.float32) * 3.0

    y = gem(x, p, eps=1e-6)
    y = jax.block_until_ready(y)

    y_ref = gem_reference(x, p, eps=1e-6)
    assert y.shape == (2, 4, 1, 1), y.shape
    assert jnp.allclose(y, y_ref, rtol=1e-4, atol=1e-5), (
        float(jnp.max(jnp.abs(y - y_ref))))

    print("KERNEL_OK")
</pallas_src>

<mosaic_0001>
module attributes {stable_mosaic.version = 11 : i64} {
  func.func @_gem_kernel(%arg0: i32, %arg1: memref<1xf32, #tpu.memory_space<smem>>, %arg2: memref<8x256xf32, #tpu.memory_space<vmem>>, %arg3: memref<8x1xf32, #tpu.memory_space<vmem>>) attributes {dimension_semantics = [#tpu.dimension_semantics<parallel>], iteration_bounds = array<i64: 1>, scalar_prefetch = 0 : i64, scratch_operands = 0 : i64, tpu.core_type = #tpu.core_type<tc>, window_params = [{transform_indices = @transform_0, window_bounds = array<i64: 1>}, {transform_indices = @transform_1, window_bounds = array<i64: 8, 256>}, {transform_indices = @transform_2, window_bounds = array<i64: 8, 1>}]} {
    %c0 = arith.constant 0 : index
    %0 = memref.load %arg1[%c0] : memref<1xf32, #tpu.memory_space<smem>>
    %cst = arith.constant 1.000000e+00 : f32
    %1 = arith.divf %cst, %0 : f32
    %c0_0 = arith.constant 0 : index
    %c0_1 = arith.constant 0 : index
    %2 = vector.load %arg2[%c0_0, %c0_1] : memref<8x256xf32, #tpu.memory_space<vmem>>, vector<8x256xf32>
    %cst_2 = arith.constant 9.99999997E-7 : f32
    %3 = vector.broadcast %cst_2 : f32 to vector<8x256xf32>
    %4 = arith.maximumf %2, %3 : vector<8x256xf32>
    %5 = math.log %4 : vector<8x256xf32>
    %6 = vector.broadcast %0 : f32 to vector<8x256xf32>
    %7 = arith.mulf %6, %5 : vector<8x256xf32>
    %8 = math.exp %7 : vector<8x256xf32>
    %cst_3 = arith.constant dense<0.000000e+00> : vector<8xf32>
    %9 = vector.multi_reduction <add>, %8, %cst_3 [1] : vector<8x256xf32> to vector<8xf32>
    %10 = vector.shape_cast %9 : vector<8xf32> to vector<8x1xf32>
    %cst_4 = arith.constant 2.560000e+02 : f32
    %11 = vector.broadcast %cst_4 : f32 to vector<8x1xf32>
    %12 = arith.divf %10, %11 : vector<8x1xf32>
    %13 = math.log %12 : vector<8x1xf32>
    %14 = vector.broadcast %1 : f32 to vector<8x1xf32>
    %15 = arith.mulf %14, %13 : vector<8x1xf32>
    %16 = math.exp %15 : vector<8x1xf32>
    %c0_5 = arith.constant 0 : index
    %c0_6 = arith.constant 0 : index
    %17 = vector.load %arg3[%c0_5, %c0_6] : memref<8x1xf32, #tpu.memory_space<vmem>>, vector<8x1xf32>
    tpu.vector_store %arg3[%c0_5, %c0_6], %16 {strides = array<i32>} : memref<8x1xf32, #tpu.memory_space<vmem>>, vector<8x1xf32>,
    return
  }
  func.func @transform_0(%arg0: i32) -> i32 {
    %c0_i32 = arith.constant 0 : i32
    %c0_i32_0 = arith.constant 0 : i32
    return %c0_i32 : i32
  }
  func.func @transform_1(%arg0: i32) -> (i32, i32) {
    %c0_i32 = arith.constant 0 : i32
    %c0_i32_0 = arith.constant 0 : i32
    return %arg0, %c0_i32 : i32, i32
  }
  func.func @transform_2(%arg0: i32) -> (i32, i32) {
    %c0_i32 = arith.constant 0 : i32
    %c0_i32_0 = arith.constant 0 : i32
    return %arg0, %c0_i32 : i32, i32
  }
}

</mosaic_0001>

<llo_original>
// kernel: tpu_custom_call.1
$region0: #{tpu_custom_call.1}
  #allocation0 [shape = 'u32[]', space=smem, size = 0x4, offset = 0x4, fixed_abs, tag = 'smem constant byte address 0x4 - core index']
  #allocation1 [shape = 'u32[144,128]{1,0:T(1,128)}', space=vmem, size = 0x12000, scoped, tag = 'internal scratch']
  #allocation2 [shape = 'f32[1]{0:T(128)S(6)}', space=smem, size = 0x200, scoped, tag = 'scoped memory for tpu_custom_call.1']
  %s0 = inlined_call_operand.<no memory space> [shape: f32[1], index: 0, kind: input, shape index: {}]
  %s1 = inlined_call_operand.hbm [shape: f32[8,256], index: 1, kind: input, shape index: {}]
  %s2 = inlined_call_operand.vmem [shape: f32[8,1], index: 2, kind: output, shape index: {}]
  %s3 = sld [smem:[#allocation0]]
  $region22: #{tpu_custom_call.1} parent=0
    _
  %s5 = ssub.s32 1, %s3
  %s6 = scalar_select 0, %s5, %s3
  %7 = sst [smem:[#allocation2]] %s0
  $region1: #{tpu_custom_call.1} parent=0
    #allocation3 [shape = 'u8[8192]{0}', space=vmem, size = 0x2000, scoped, tag = 'input window, operand 1, single buffered']
    #allocation4 [shape = 's32[1]{0}', space=sflag, size = 0x4, scoped, tag = 'scoped memory for tpu_custom_call.1']
    %8 = vsyncpa [#allocation4], 0
    // Predicated region
    $region2: #{tpu_custom_call.1} parent=1 // pred_check
      _
    $region3: #{tpu_custom_call.1} parent=1 // pred_check_branch
      %10 = sbr.rel (0) target = $region5
    $region4: #{tpu_custom_call.1} parent=1 // pred_region
      _
    $region5: #{tpu_custom_call.1} parent=1 // pred_fallthru
      _
    // Predicated region
    $region6: #{tpu_custom_call.1} parent=1 // pred_check
      _
    $region7: #{tpu_custom_call.1} parent=1 // pred_check_branch
      %12 = sbr.rel (0) target = $region9
    $region8: #{tpu_custom_call.1} parent=1 // pred_region
      %s14 = ssub.s32 256, 256
      %15 = vsyncadd [#allocation4], %s14
      %s17 = sshll.u32 [#allocation3], 4
      %s18 = int_to_ptr.vmem [resolvable:$true] %s17
      %20 = dma.hbm_to_vmem [thread:$0]  %s1, 256, %s18, [#allocation4]
    $region9: #{tpu_custom_call.1} parent=1 // pred_fallthru
      _
    // Predicated region
    $region10: #{tpu_custom_call.1} parent=1 // pred_check
      _
    $region11: #{tpu_custom_call.1} parent=1 // pred_check_branch
      %22 = sbr.rel (0) target = $region13
    $region12: #{tpu_custom_call.1} parent=1 // pred_region
      %23 = dma.done [#allocation4], 256
    $region13: #{tpu_custom_call.1} parent=1 // pred_fallthru
      _
    %s24 = sld [smem:[#allocation2]]
    %v25 = vstv %s24
    %v26 = vrcp.pop %v25
    %s27 = vtos %v26
    %v28 = vld [vmem:[#allocation3] sm:$0xff]
    %v29 = vld [vmem:[#allocation3 + $0x8] sm:$0xff]
    %v30 = vmax.f32 %v28, 1e-06
    %v31 = vmax.f32 %v29, 1e-06
    %v32 = vlog2.pop %v30
    %v33 = vmul.f32 %v32, 0.6931472
    %v34 = vlog2.pop %v31
    %v35 = vmul.f32 %v34, 0.6931472
    %v36 = vstv %s24
    %v37 = vmul.f32 %v36, %v33
    %v38 = vmul.f32 %v36, %v35
    %v39 = vmul.f32 %v37, 1.442695
    %v40 = vpow.pop %v39
    %v41 = vmul.f32 %v38, 1.442695
    %v42 = vpow.pop %v41
    %v43 = vadd.f32 %v40, %v42
    %44 = vadd.xlane.f32.xlu0 %v43
    %v45 = vpop.xlane.xlu0 %44
    %v46 = vrcp.pop 256.0
    %v47 = vmul.f32 %v45, %v46
    %v48 = vlog2.pop %v47
    %v49 = vmul.f32 %v48, 0.6931472
    %v50 = vstv %s27
    %v51 = vmul.f32 %v50, %v49
    %v52 = vmul.f32 %v51, 1.442695
    %v53 = vpow.pop %v52
    %vm54 = vcmask 7168
    %55 = vst.msk [vmem:[%s2] sm:$0xff] %vm54, %v53
    // Predicated region
    $region14: #{tpu_custom_call.1} parent=1 // pred_check
      _
    $region15: #{tpu_custom_call.1} parent=1 // pred_check_branch
      %57 = sbr.rel (0) target = $region17
    $region16: #{tpu_custom_call.1} parent=1 // pred_region
      _
    $region17: #{tpu_custom_call.1} parent=1 // pred_fallthru
      _
    // Predicated region
    $region18: #{tpu_custom_call.1} parent=1 // pred_check
      _
    $region19: #{tpu_custom_call.1} parent=1 // pred_check_branch
      %59 = sbr.rel (0) target = $region21
    $region20: #{tpu_custom_call.1} parent=1 // pred_region
      _
    $region21: #{tpu_custom_call.1} parent=1 // pred_fallthru
      _
    %60 = vsyncpa [#allocation4], 1

</llo_original>
